<compile_context>
chip_gen: v7x
topology: tpu7x:2x2x1
jax: 0.10.0
libtpu: 0.0.40
codegen_flags: <defaults>
</compile_context>

<pallas_src>
import functools
from typing import NamedTuple

import numpy as np
import jax
import jax.numpy as jnp
from jax import lax
from jax.experimental import pallas as pl
from jax.experimental.pallas import tpu as pltpu


class LayerCfg(NamedTuple):
    cin: int
    cout: int
    kh: int
    kw: int
    stride: int
    pad: int
    dil: int
    h: int
    w: int
    ho: int
    wo: int


def _augment_weight(w_oihw):
    """[Cout, Cin, kh, kw] -> [Cout+1, kh*kw*(Cin+1)].

    Extra input channel = validity mask (weight 0 for the conv rows);
    extra output row = mask count (weight 1 on the mask channel, 0 elsewhere).
    Contraction index order is ((i*kw + j)*(Cin+1) + c), matching the in-kernel
    im2col patch layout.
    """
    cout, cin, kh, kw = w_oihw.shape
    w_hwio = jnp.transpose(w_oihw, (2, 3, 1, 0)).astype(jnp.float32)      # [kh,kw,Cin,Cout]
    w_hwio = jnp.concatenate(
        [w_hwio, jnp.zeros((kh, kw, 1, cout), jnp.float32)], axis=2)       # mask-in channel
    count_col = jnp.zeros((kh, kw, cin + 1, 1), jnp.float32)
    count_col = count_col.at[:, :, cin, 0].set(1.0)                        # count-out column
    w_full = jnp.concatenate([w_hwio, count_col], axis=3)                  # [kh,kw,Cin+1,Cout+1]
    return w_full.reshape(kh * kw * (cin + 1), cout + 1).T                 # [Cout+1, K]


def _tap_masks(cfg):
    """Border-validity masks per (i,j) tap for the stride-1 'same' roll path.

    mask[t, y*W + x] = 1 iff (y + i*dil - pad, x + j*dil - pad) is in bounds,
    i.e. the tap reads real data (zero-padding region -> 0).
    """
    masks = np.zeros((cfg.kh * cfg.kw, cfg.h * cfg.w), np.float32)
    ys = np.arange(cfg.h)[:, None]
    xs = np.arange(cfg.w)[None, :]
    for i in range(cfg.kh):
        for j in range(cfg.kw):
            di = i * cfg.dil - cfg.pad
            dj = j * cfg.dil - cfg.pad
            ok = ((ys + di >= 0) & (ys + di < cfg.h) &
                  (xs + dj >= 0) & (xs + dj < cfg.w))
            masks[i * cfg.kw + j] = ok.reshape(-1).astype(np.float32)
    return masks


def _map_conv_kernel(*refs, cfgs, use_roll, has_pad):
    """All MapConv layers for one batch element.

    refs = (x_ref,
            w2d_0, b_0, [tapmask_0],
            w2d_1, b_1, [tapmask_1], ...,
            out_ref, [pad_scratch])
      x_ref    : [1, Cin0+1, H0*W0]   channels + validity-mask row, channel-major
      w2d_l    : [Cout_l+1, kh*kw*(Cin_l+1)]   augmented weights
      b_l      : [Cout_l, 1]
      tapmask_l: [kh*kw, H*W]  (only for roll-path layers)
      out      : [1, Cout_last, Hlast*Wlast]
      pad      : VMEM scratch for the padded-input fallback path (if any layer
                 has stride != 1 or changes the spatial size)
    """
    n_layers = len(cfgs)
    idx = 0
    x_ref = refs[idx]
    idx += 1
    layer_refs = []
    for l in range(n_layers):
        w_ref, b_ref = refs[idx], refs[idx + 1]
        idx += 2
        m_ref = None
        if use_roll[l]:
            m_ref = refs[idx]
            idx += 1
        layer_refs.append((w_ref, b_ref, m_ref))
    out_ref = refs[idx]
    idx += 1
    pad_ref = refs[idx] if has_pad else None

    state = x_ref[0]                                   # [Cin0+1, H0*W0]
    for l, cfg in enumerate(cfgs):
        w_ref, b_ref, m_ref = layer_refs[l]
        w2d = w_ref[...]                               # [Cout+1, K]
        b = b_ref[...]                                 # [Cout, 1]
        c1 = cfg.cin + 1

        if use_roll[l]:
            # Lane-dense im2col: one flat roll (+ border mask) per tap; the
            # activations never leave the [C, H*W] layout.
            mvals = m_ref[...]                         # [kh*kw, H*W]
            taps = []
            for i in range(cfg.kh):
                for j in range(cfg.kw):
                    t = i * cfg.kw + j
                    di = i * cfg.dil - cfg.pad
                    dj = j * cfg.dil - cfg.pad
                    off = di * cfg.w + dj
                    shifted = state if off == 0 else jnp.roll(state, -off, axis=1)
                    if di == 0 and dj == 0:            # interior tap: mask is all ones
                        taps.append(shifted)
                    else:
                        taps.append(shifted * mvals[t:t + 1, :])
            patch = jnp.concatenate(taps, axis=0)      # [kh*kw*C1, H*W] (lane-dense)
        else:
            # General path: zero-pad in VMEM scratch, strided slice per tap.
            hp, wp = cfg.h + 2 * cfg.pad, cfg.w + 2 * cfg.pad
            pad_ref[0:c1, 0:hp, 0:wp] = jnp.zeros((c1, hp, wp), jnp.float32)
            pad_ref[0:c1, cfg.pad:cfg.pad + cfg.h, cfg.pad:cfg.pad + cfg.w] = (
                state.reshape(c1, cfg.h, cfg.w))
            xp = pad_ref[0:c1, 0:hp, 0:wp]             # [C1, Hp, Wp]
            taps = []
            for i in range(cfg.kh):
                for j in range(cfg.kw):
                    h0 = i * cfg.dil
                    w0 = j * cfg.dil
                    taps.append(lax.slice(
                        xp,
                        (0, h0, w0),
                        (c1, h0 + (cfg.ho - 1) * cfg.stride + 1,
                             w0 + (cfg.wo - 1) * cfg.stride + 1),
                        (1, cfg.stride, cfg.stride)))  # [C1, Ho, Wo]
            patch = jnp.concatenate(taps, axis=0).reshape(
                cfg.kh * cfg.kw * c1, cfg.ho * cfg.wo)

        # One MXU matmul per layer: conv output rows + mask-count row.
        acc = jnp.dot(w2d, patch, preferred_element_type=jnp.float32)   # [Cout+1, Ho*Wo]
        conv = acc[0:cfg.cout, :]
        cnt = jnp.floor(acc[cfg.cout:cfg.cout + 1, :] + 0.5)            # exact integer count
        valid = cnt > 0.0
        inv = jnp.where(valid,
                        pl.reciprocal(jnp.where(valid, cnt, 1.0), approx=True),
                        0.0)                                            # masked_weight
        y = jnp.maximum(conv + b, 0.0) * inv                            # relu(conv+b)*mw

        if l + 1 < len(cfgs):
            state = jnp.concatenate([y, valid.astype(jnp.float32)], axis=0)
        else:
            out_ref[0] = y


def map_conv_forward(x_nchw, mask_nchw, params, strides, paddings, dilations):
    """MapConv.forward.  x: [N, Cin, H, W], mask: [N, 1, H, W], params OIHW."""
    x = x_nchw.astype(jnp.float32)
    mask = mask_nchw.astype(jnp.float32)
    n, cin0, h0, w0 = x.shape

    # Static per-layer shape configs.
    cfgs, use_roll = [], []
    h, w, cin = h0, w0, cin0
    for (wgt, _), s, p, d in zip(params, strides, paddings, dilations):
        cout, cin_w, kh, kw = wgt.shape
        assert cin_w == cin
        ho = (h + 2 * p - d * (kh - 1) - 1) // s + 1
        wo = (w + 2 * p - d * (kw - 1) - 1) // s + 1
        cfgs.append(LayerCfg(cin, cout, kh, kw, s, p, d, h, w, ho, wo))
        use_roll.append(s == 1 and ho == h and wo == w)   # 'same' conv -> roll path
        h, w, cin = ho, wo, cout
    h_last, w_last, c_last = h, w, cin

    # Channel-major input with the validity mask appended as the last channel.
    xm = jnp.concatenate([x, mask], axis=1).reshape(n, cin0 + 1, h0 * w0)

    extra_inputs, extra_specs = [], []
    for l, ((wgt, bias), cfg) in enumerate(zip(params, cfgs)):
        w2d = _augment_weight(wgt)
        b2 = bias.reshape(cfg.cout, 1).astype(jnp.float32)
        extra_inputs += [w2d, b2]
        # Constant index maps -> weights/bias/masks stay VMEM-resident across the grid.
        extra_specs += [pl.BlockSpec(w2d.shape, lambda i: (0, 0)),
                        pl.BlockSpec(b2.shape, lambda i: (0, 0))]
        if use_roll[l]:
            tm = jnp.asarray(_tap_masks(cfg))
            extra_inputs.append(tm)
            extra_specs.append(pl.BlockSpec(tm.shape, lambda i: (0, 0)))

    has_pad = not all(use_roll)
    scratch_shapes = []
    if has_pad:
        fb = [c for c, r in zip(cfgs, use_roll) if not r]
        c1max = max(c.cin + 1 for c in fb)
        hpmax = max(c.h + 2 * c.pad for c in fb)
        wpmax = max(c.w + 2 * c.pad for c in fb)
        scratch_shapes = [pltpu.VMEM((c1max, hpmax, wpmax), jnp.float32)]

    kernel = functools.partial(_map_conv_kernel, cfgs=tuple(cfgs),
                               use_roll=tuple(use_roll), has_pad=has_pad)
    out = pl.pallas_call(
        kernel,
        grid=(n,),
        in_specs=[pl.BlockSpec((1, cin0 + 1, h0 * w0), lambda i: (i, 0, 0))] + extra_specs,
        out_specs=pl.BlockSpec((1, c_last, h_last * w_last), lambda i: (i, 0, 0)),
        out_shape=jax.ShapeDtypeStruct((n, c_last, h_last * w_last), jnp.float32),
        scratch_shapes=scratch_shapes,
        compiler_params=pltpu.CompilerParams(
            dimension_semantics=("parallel",),          # 2 TCs on v7x; no-op on v5e/v6e
            vmem_limit_bytes=32 * 1024 * 1024),
    )(xm, *extra_inputs)

    return out.reshape(n, c_last, h_last, w_last)       # already NCHW


def ref_forward(x_nchw, mask_nchw, params, strides, paddings, dilations):
    """Pure-JAX reference mirroring the PyTorch module."""
    x = x_nchw.astype(jnp.float32)
    m = mask_nchw.astype(jnp.float32)
    for (w, b), s, p, d in zip(params, strides, paddings, dilations):
        cout, cin, kh, kw = w.shape
        x = lax.conv_general_dilated(
            x, w.astype(jnp.float32), (s, s), ((p, p), (p, p)), rhs_dilation=(d, d),
            dimension_numbers=('NCHW', 'OIHW', 'NCHW'),
            precision=lax.Precision.HIGHEST)
        x = jnp.maximum(x + b.reshape(1, -1, 1, 1), 0.0)
        ones = jnp.ones((1, 1, kh, kw), jnp.float32)
        mw = jnp.round(lax.conv_general_dilated(
            m, ones, (s, s), ((p, p), (p, p)), rhs_dilation=(d, d),
            dimension_numbers=('NCHW', 'OIHW', 'NCHW')))
        mw = jnp.where(mw > 0, 1.0 / mw, 0.0)
        m = (mw > 0).astype(jnp.float32)
        x = x * mw
    return x


if __name__ == "__main__":
    # cfg (small, consistent with the module)
    INPUT_SIZE = 4
    HIDDEN_SIZES = [8, 8]
    KERNEL_SIZES = [3, 3]
    STRIDES = [1, 1]
    PADDINGS = [1, 1]
    DILATIONS = [1, 1]
    N, T = 2, 16

    key = jax.random.PRNGKey(0)
    kx, *kws = jax.random.split(key, 1 + 2 * len(HIDDEN_SIZES))

    # NCHW input, as in the PyTorch module.
    x = jax.random.normal(kx, (N, INPUT_SIZE, T, T), jnp.float32)
    # 2D-TAN style map mask: valid upper-triangular (start <= end) positions.
    mask2d = jnp.triu(jnp.ones((T, T), jnp.float32))
    mask = jnp.broadcast_to(mask2d, (N, 1, T, T))

    # Deterministic nn.Conv2d-compatible parameters, stored OIHW like PyTorch.
    channel_sizes = [INPUT_SIZE] + HIDDEN_SIZES
    params = []
    for i, k in enumerate(KERNEL_SIZES):
        cin, cout = channel_sizes[i], channel_sizes[i + 1]
        w = 0.1 * jax.random.normal(kws[2 * i], (cout, cin, k, k), jnp.float32)
        b = 0.1 * jax.random.normal(kws[2 * i + 1], (cout,), jnp.float32)
        params.append((w, b))

    out = map_conv_forward(x, mask, params, STRIDES, PADDINGS, DILATIONS)
    out = jax.block_until_ready(out)
    assert out.shape == (N, HIDDEN_SIZES[-1], T, T)

    ref = ref_forward(x, mask, params, STRIDES, PADDINGS, DILATIONS)

    np.testing.assert_allclose(np.asarray(out), np.asarray(ref),
                               rtol=1e-2, atol=1e-2)
    print("KERNEL_OK")
</pallas_src>

<mosaic_0001>
module attributes {stable_mosaic.version = 11 : i64} {
  func.func @_map_conv_kernel(%arg0: i32, %arg1: memref<1x5x256xf32, #tpu.memory_space<vmem>>, %arg2: memref<9x45xf32, #tpu.memory_space<vmem>>, %arg3: memref<8x1xf32, #tpu.memory_space<vmem>>, %arg4: memref<9x256xf32, #tpu.memory_space<vmem>>, %arg5: memref<9x81xf32, #tpu.memory_space<vmem>>, %arg6: memref<8x1xf32, #tpu.memory_space<vmem>>, %arg7: memref<9x256xf32, #tpu.memory_space<vmem>>, %arg8: memref<1x8x256xf32, #tpu.memory_space<vmem>>) attributes {dimension_semantics = [#tpu.dimension_semantics<parallel>], iteration_bounds = array<i64: 2>, scalar_prefetch = 0 : i64, scratch_operands = 0 : i64, tpu.core_type = #tpu.core_type<tc>, window_params = [{transform_indices = @transform_0, window_bounds = array<i64: 1, 5, 256>}, {pipeline_mode = #tpu.pipeline_mode<synchronous>, transform_indices = @transform_1, window_bounds = array<i64: 9, 45>}, {pipeline_mode = #tpu.pipeline_mode<synchronous>, transform_indices = @transform_2, window_bounds = array<i64: 8, 1>}, {pipeline_mode = #tpu.pipeline_mode<synchronous>, transform_indices = @transform_3, window_bounds = array<i64: 9, 256>}, {pipeline_mode = #tpu.pipeline_mode<synchronous>, transform_indices = @transform_4, window_bounds = array<i64: 9, 81>}, {pipeline_mode = #tpu.pipeline_mode<synchronous>, transform_indices = @transform_5, window_bounds = array<i64: 8, 1>}, {pipeline_mode = #tpu.pipeline_mode<synchronous>, transform_indices = @transform_6, window_bounds = array<i64: 9, 256>}, {transform_indices = @transform_7, window_bounds = array<i64: 1, 8, 256>}]} {
    %c0 = arith.constant 0 : index
    %c0_0 = arith.constant 0 : index
    %c0_1 = arith.constant 0 : index
    %0 = vector.load %arg1[%c0, %c0_0, %c0_1] : memref<1x5x256xf32, #tpu.memory_space<vmem>>, vector<1x5x256xf32>
    %1 = vector.shape_cast %0 : vector<1x5x256xf32> to vector<5x256xf32>
    %c0_2 = arith.constant 0 : index
    %c0_3 = arith.constant 0 : index
    %2 = vector.load %arg2[%c0_2, %c0_3] : memref<9x45xf32, #tpu.memory_space<vmem>>, vector<9x45xf32>
    %c0_4 = arith.constant 0 : index
    %c0_5 = arith.constant 0 : index
    %3 = vector.load %arg3[%c0_4, %c0_5] : memref<8x1xf32, #tpu.memory_space<vmem>>, vector<8x1xf32>
    %c0_6 = arith.constant 0 : index
    %c0_7 = arith.constant 0 : index
    %4 = vector.load %arg4[%c0_6, %c0_7] : memref<9x256xf32, #tpu.memory_space<vmem>>, vector<9x256xf32>
    %5 = vector.extract_strided_slice %1 {offsets = [0, 239], sizes = [5, 17], strides = [1, 1]} : vector<5x256xf32> to vector<5x17xf32>
    %6 = vector.extract_strided_slice %1 {offsets = [0, 0], sizes = [5, 239], strides = [1, 1]} : vector<5x256xf32> to vector<5x239xf32>
    %7 = tpu.concatenate %5, %6 in 1 : vector<5x17xf32>, vector<5x239xf32> -> vector<5x256xf32>
    %8 = vector.extract_strided_slice %4 {offsets = [0, 0], sizes = [1, 256], strides = [1, 1]} : vector<9x256xf32> to vector<1x256xf32>
    %9 = vector.broadcast %8 : vector<1x256xf32> to vector<5x256xf32>
    %10 = arith.mulf %7, %9 : vector<5x256xf32>
    %11 = vector.extract_strided_slice %1 {offsets = [0, 240], sizes = [5, 16], strides = [1, 1]} : vector<5x256xf32> to vector<5x16xf32>
    %12 = vector.extract_strided_slice %1 {offsets = [0, 0], sizes = [5, 240], strides = [1, 1]} : vector<5x256xf32> to vector<5x240xf32>
    %13 = tpu.concatenate %11, %12 in 1 : vector<5x16xf32>, vector<5x240xf32> -> vector<5x256xf32>
    %14 = vector.extract_strided_slice %4 {offsets = [1, 0], sizes = [1, 256], strides = [1, 1]} : vector<9x256xf32> to vector<1x256xf32>
    %15 = vector.broadcast %14 : vector<1x256xf32> to vector<5x256xf32>
    %16 = arith.mulf %13, %15 : vector<5x256xf32>
    %17 = vector.extract_strided_slice %1 {offsets = [0, 241], sizes = [5, 15], strides = [1, 1]} : vector<5x256xf32> to vector<5x15xf32>
    %18 = vector.extract_strided_slice %1 {offsets = [0, 0], sizes = [5, 241], strides = [1, 1]} : vector<5x256xf32> to vector<5x241xf32>
    %19 = tpu.concatenate %17, %18 in 1 : vector<5x15xf32>, vector<5x241xf32> -> vector<5x256xf32>
    %20 = vector.extract_strided_slice %4 {offsets = [2, 0], sizes = [1, 256], strides = [1, 1]} : vector<9x256xf32> to vector<1x256xf32>
    %21 = vector.broadcast %20 : vector<1x256xf32> to vector<5x256xf32>
    %22 = arith.mulf %19, %21 : vector<5x256xf32>
    %23 = vector.extract_strided_slice %1 {offsets = [0, 255], sizes = [5, 1], strides = [1, 1]} : vector<5x256xf32> to vector<5x1xf32>
    %24 = vector.extract_strided_slice %1 {offsets = [0, 0], sizes = [5, 255], strides = [1, 1]} : vector<5x256xf32> to vector<5x255xf32>
    %25 = tpu.concatenate %23, %24 in 1 : vector<5x1xf32>, vector<5x255xf32> -> vector<5x256xf32>
    %26 = vector.extract_strided_slice %4 {offsets = [3, 0], sizes = [1, 256], strides = [1, 1]} : vector<9x256xf32> to vector<1x256xf32>
    %27 = vector.broadcast %26 : vector<1x256xf32> to vector<5x256xf32>
    %28 = arith.mulf %25, %27 : vector<5x256xf32>
    %29 = vector.extract_strided_slice %1 {offsets = [0, 1], sizes = [5, 255], strides = [1, 1]} : vector<5x256xf32> to vector<5x255xf32>
    %30 = vector.extract_strided_slice %1 {offsets = [0, 0], sizes = [5, 1], strides = [1, 1]} : vector<5x256xf32> to vector<5x1xf32>
    %31 = tpu.concatenate %29, %30 in 1 : vector<5x255xf32>, vector<5x1xf32> -> vector<5x256xf32>
    %32 = vector.extract_strided_slice %4 {offsets = [5, 0], sizes = [1, 256], strides = [1, 1]} : vector<9x256xf32> to vector<1x256xf32>
    %33 = vector.broadcast %32 : vector<1x256xf32> to vector<5x256xf32>
    %34 = arith.mulf %31, %33 : vector<5x256xf32>
    %35 = vector.extract_strided_slice %1 {offsets = [0, 15], sizes = [5, 241], strides = [1, 1]} : vector<5x256xf32> to vector<5x241xf32>
    %36 = vector.extract_strided_slice %1 {offsets = [0, 0], sizes = [5, 15], strides = [1, 1]} : vector<5x256xf32> to vector<5x15xf32>
    %37 = tpu.concatenate %35, %36 in 1 : vector<5x241xf32>, vector<5x15xf32> -> vector<5x256xf32>
    %38 = vector.extract_strided_slice %4 {offsets = [6, 0], sizes = [1, 256], strides = [1, 1]} : vector<9x256xf32> to vector<1x256xf32>
    %39 = vector.broadcast %38 : vector<1x256xf32> to vector<5x256xf32>
    %40 = arith.mulf %37, %39 : vector<5x256xf32>
    %41 = vector.extract_strided_slice %1 {offsets = [0, 16], sizes = [5, 240], strides = [1, 1]} : vector<5x256xf32> to vector<5x240xf32>
    %42 = vector.extract_strided_slice %1 {offsets = [0, 0], sizes = [5, 16], strides = [1, 1]} : vector<5x256xf32> to vector<5x16xf32>
    %43 = tpu.concatenate %41, %42 in 1 : vector<5x240xf32>, vector<5x16xf32> -> vector<5x256xf32>
    %44 = vector.extract_strided_slice %4 {offsets = [7, 0], sizes = [1, 256], strides = [1, 1]} : vector<9x256xf32> to vector<1x256xf32>
    %45 = vector.broadcast %44 : vector<1x256xf32> to vector<5x256xf32>
    %46 = arith.mulf %43, %45 : vector<5x256xf32>
    %47 = vector.extract_strided_slice %1 {offsets = [0, 17], sizes = [5, 239], strides = [1, 1]} : vector<5x256xf32> to vector<5x239xf32>
    %48 = vector.extract_strided_slice %1 {offsets = [0, 0], sizes = [5, 17], strides = [1, 1]} : vector<5x256xf32> to vector<5x17xf32>
    %49 = tpu.concatenate %47, %48 in 1 : vector<5x239xf32>, vector<5x17xf32> -> vector<5x256xf32>
    %50 = vector.extract_strided_slice %4 {offsets = [8, 0], sizes = [1, 256], strides = [1, 1]} : vector<9x256xf32> to vector<1x256xf32>
    %51 = vector.broadcast %50 : vector<1x256xf32> to vector<5x256xf32>
    %52 = arith.mulf %49, %51 : vector<5x256xf32>
    %53 = tpu.concatenate %10, %16, %22, %28, %1, %34, %40, %46, %52 in 0 : vector<5x256xf32>, vector<5x256xf32>, vector<5x256xf32>, vector<5x256xf32>, vector<5x256xf32>, vector<5x256xf32>, vector<5x256xf32>, vector<5x256xf32>, vector<5x256xf32> -> vector<45x256xf32>
    %cst = arith.constant dense<0.000000e+00> : vector<9x256xf32>
    %54 = tpu.matmul %2, %53, %cst {dimension_numbers = #tpu.dot_dimension_numbers<[1], [0], [0], [1], [0, 0, 1, 1], [], []>} : vector<9x45xf32>, vector<45x256xf32>, vector<9x256xf32> -> vector<9x256xf32>
    %55 = vector.extract_strided_slice %54 {offsets = [0, 0], sizes = [8, 256], strides = [1, 1]} : vector<9x256xf32> to vector<8x256xf32>
    %56 = vector.extract_strided_slice %54 {offsets = [8, 0], sizes = [1, 256], strides = [1, 1]} : vector<9x256xf32> to vector<1x256xf32>
    %cst_8 = arith.constant 5.000000e-01 : f32
    %57 = vector.broadcast %cst_8 : f32 to vector<1x256xf32>
    %58 = arith.addf %56, %57 : vector<1x256xf32>
    %59 = math.floor %58 : vector<1x256xf32>
    %cst_9 = arith.constant 0.000000e+00 : f32
    %60 = vector.broadcast %cst_9 : f32 to vector<1x256xf32>
    %61 = arith.cmpf ogt, %59, %60 : vector<1x256xf32>
    %cst_10 = arith.constant 1.000000e+00 : f32
    %62 = vector.broadcast %cst_10 : f32 to vector<1x256xf32>
    %63 = arith.select %61, %59, %62 : vector<1x256xi1>, vector<1x256xf32>
    %64 = tpu.reciprocal %63 {approx = true} : vector<1x256xf32> -> vector<1x256xf32>
    %cst_11 = arith.constant 0.000000e+00 : f32
    %65 = vector.broadcast %cst_11 : f32 to vector<1x256xf32>
    %66 = arith.select %61, %64, %65 : vector<1x256xi1>, vector<1x256xf32>
    %67 = vector.broadcast %3 : vector<8x1xf32> to vector<8x256xf32>
    %68 = arith.addf %55, %67 : vector<8x256xf32>
    %cst_12 = arith.constant 0.000000e+00 : f32
    %69 = vector.broadcast %cst_12 : f32 to vector<8x256xf32>
    %70 = arith.maximumf %68, %69 : vector<8x256xf32>
    %71 = vector.broadcast %66 : vector<1x256xf32> to vector<8x256xf32>
    %72 = arith.mulf %70, %71 : vector<8x256xf32>
    %73 = arith.extui %61 : vector<1x256xi1> to vector<1x256xi32>
    %74 = arith.sitofp %73 : vector<1x256xi32> to vector<1x256xf32>
    %75 = tpu.concatenate %72, %74 in 0 : vector<8x256xf32>, vector<1x256xf32> -> vector<9x256xf32>
    %c0_13 = arith.constant 0 : index
    %c0_14 = arith.constant 0 : index
    %76 = vector.load %arg5[%c0_13, %c0_14] : memref<9x81xf32, #tpu.memory_space<vmem>>, vector<9x81xf32>
    %c0_15 = arith.constant 0 : index
    %c0_16 = arith.constant 0 : index
    %77 = vector.load %arg6[%c0_15, %c0_16] : memref<8x1xf32, #tpu.memory_space<vmem>>, vector<8x1xf32>
    %c0_17 = arith.constant 0 : index
    %c0_18 = arith.constant 0 : index
    %78 = vector.load %arg7[%c0_17, %c0_18] : memref<9x256xf32, #tpu.memory_space<vmem>>, vector<9x256xf32>
    %79 = vector.extract_strided_slice %75 {offsets = [0, 239], sizes = [9, 17], strides = [1, 1]} : vector<9x256xf32> to vector<9x17xf32>
    %80 = vector.extract_strided_slice %75 {offsets = [0, 0], sizes = [9, 239], strides = [1, 1]} : vector<9x256xf32> to vector<9x239xf32>
    %81 = tpu.concatenate %79, %80 in 1 : vector<9x17xf32>, vector<9x239xf32> -> vector<9x256xf32>
    %82 = vector.extract_strided_slice %78 {offsets = [0, 0], sizes = [1, 256], strides = [1, 1]} : vector<9x256xf32> to vector<1x256xf32>
    %83 = vector.broadcast %82 : vector<1x256xf32> to vector<9x256xf32>
    %84 = arith.mulf %81, %83 : vector<9x256xf32>
    %85 = vector.extract_strided_slice %75 {offsets = [0, 240], sizes = [9, 16], strides = [1, 1]} : vector<9x256xf32> to vector<9x16xf32>
    %86 = vector.extract_strided_slice %75 {offsets = [0, 0], sizes = [9, 240], strides = [1, 1]} : vector<9x256xf32> to vector<9x240xf32>
    %87 = tpu.concatenate %85, %86 in 1 : vector<9x16xf32>, vector<9x240xf32> -> vector<9x256xf32>
    %88 = vector.extract_strided_slice %78 {offsets = [1, 0], sizes = [1, 256], strides = [1, 1]} : vector<9x256xf32> to vector<1x256xf32>
    %89 = vector.broadcast %88 : vector<1x256xf32> to vector<9x256xf32>
    %90 = arith.mulf %87, %89 : vector<9x256xf32>
    %91 = vector.extract_strided_slice %75 {offsets = [0, 241], sizes = [9, 15], strides = [1, 1]} : vector<9x256xf32> to vector<9x15xf32>
    %92 = vector.extract_strided_slice %75 {offsets = [0, 0], sizes = [9, 241], strides = [1, 1]} : vector<9x256xf32> to vector<9x241xf32>
    %93 = tpu.concatenate %91, %92 in 1 : vector<9x15xf32>, vector<9x241xf32> -> vector<9x256xf32>
    %94 = vector.extract_strided_slice %78 {offsets = [2, 0], sizes = [1, 256], strides = [1, 1]} : vector<9x256xf32> to vector<1x256xf32>
    %95 = vector.broadcast %94 : vector<1x256xf32> to vector<9x256xf32>
    %96 = arith.mulf %93, %95 : vector<9x256xf32>
    %97 = vector.extract_strided_slice %75 {offsets = [0, 255], sizes = [9, 1], strides = [1, 1]} : vector<9x256xf32> to vector<9x1xf32>
    %98 = vector.extract_strided_slice %75 {offsets = [0, 0], sizes = [9, 255], strides = [1, 1]} : vector<9x256xf32> to vector<9x255xf32>
    %99 = tpu.concatenate %97, %98 in 1 : vector<9x1xf32>, vector<9x255xf32> -> vector<9x256xf32>
    %100 = vector.extract_strided_slice %78 {offsets = [3, 0], sizes = [1, 256], strides = [1, 1]} : vector<9x256xf32> to vector<1x256xf32>
    %101 = vector.broadcast %100 : vector<1x256xf32> to vector<9x256xf32>
    %102 = arith.mulf %99, %101 : vector<9x256xf32>
    %103 = vector.extract_strided_slice %75 {offsets = [0, 1], sizes = [9, 255], strides = [1, 1]} : vector<9x256xf32> to vector<9x255xf32>
    %104 = vector.extract_strided_slice %75 {offsets = [0, 0], sizes = [9, 1], strides = [1, 1]} : vector<9x256xf32> to vector<9x1xf32>
    %105 = tpu.concatenate %103, %104 in 1 : vector<9x255xf32>, vector<9x1xf32> -> vector<9x256xf32>
    %106 = vector.extract_strided_slice %78 {offsets = [5, 0], sizes = [1, 256], strides = [1, 1]} : vector<9x256xf32> to vector<1x256xf32>
    %107 = vector.broadcast %106 : vector<1x256xf32> to vector<9x256xf32>
    %108 = arith.mulf %105, %107 : vector<9x256xf32>
    %109 = vector.extract_strided_slice %75 {offsets = [0, 15], sizes = [9, 241], strides = [1, 1]} : vector<9x256xf32> to vector<9x241xf32>
    %110 = vector.extract_strided_slice %75 {offsets = [0, 0], sizes = [9, 15], strides = [1, 1]} : vector<9x256xf32> to vector<9x15xf32>
    %111 = tpu.concatenate %109, %110 in 1 : vector<9x241xf32>, vector<9x15xf32> -> vector<9x256xf32>
    %112 = vector.extract_strided_slice %78 {offsets = [6, 0], sizes = [1, 256], strides = [1, 1]} : vector<9x256xf32> to vector<1x256xf32>
    %113 = vector.broadcast %112 : vector<1x256xf32> to vector<9x256xf32>
    %114 = arith.mulf %111, %113 : vector<9x256xf32>
    %115 = vector.extract_strided_slice %75 {offsets = [0, 16], sizes = [9, 240], strides = [1, 1]} : vector<9x256xf32> to vector<9x240xf32>
    %116 = vector.extract_strided_slice %75 {offsets = [0, 0], sizes = [9, 16], strides = [1, 1]} : vector<9x256xf32> to vector<9x16xf32>
    %117 = tpu.concatenate %115, %116 in 1 : vector<9x240xf32>, vector<9x16xf32> -> vector<9x256xf32>
    %118 = vector.extract_strided_slice %78 {offsets = [7, 0], sizes = [1, 256], strides = [1, 1]} : vector<9x256xf32> to vector<1x256xf32>
    %119 = vector.broadcast %118 : vector<1x256xf32> to vector<9x256xf32>
    %120 = arith.mulf %117, %119 : vector<9x256xf32>
    %121 = vector.extract_strided_slice %75 {offsets = [0, 17], sizes = [9, 239], strides = [1, 1]} : vector<9x256xf32> to vector<9x239xf32>
    %122 = vector.extract_strided_slice %75 {offsets = [0, 0], sizes = [9, 17], strides = [1, 1]} : vector<9x256xf32> to vector<9x17xf32>
    %123 = tpu.concatenate %121, %122 in 1 : vector<9x239xf32>, vector<9x17xf32> -> vector<9x256xf32>
    %124 = vector.extract_strided_slice %78 {offsets = [8, 0], sizes = [1, 256], strides = [1, 1]} : vector<9x256xf32> to vector<1x256xf32>
    %125 = vector.broadcast %124 : vector<1x256xf32> to vector<9x256xf32>
    %126 = arith.mulf %123, %125 : vector<9x256xf32>
    %127 = tpu.concatenate %84, %90, %96, %102, %75, %108, %114, %120, %126 in 0 : vector<9x256xf32>, vector<9x256xf32>, vector<9x256xf32>, vector<9x256xf32>, vector<9x256xf32>, vector<9x256xf32>, vector<9x256xf32>, vector<9x256xf32>, vector<9x256xf32> -> vector<81x256xf32>
    %cst_19 = arith.constant dense<0.000000e+00> : vector<9x256xf32>
    %128 = tpu.matmul %76, %127, %cst_19 {dimension_numbers = #tpu.dot_dimension_numbers<[1], [0], [0], [1], [0, 0, 1, 1], [], []>} : vector<9x81xf32>, vector<81x256xf32>, vector<9x256xf32> -> vector<9x256xf32>
    %129 = vector.extract_strided_slice %128 {offsets = [0, 0], sizes = [8, 256], strides = [1, 1]} : vector<9x256xf32> to vector<8x256xf32>
    %130 = vector.extract_strided_slice %128 {offsets = [8, 0], sizes = [1, 256], strides = [1, 1]} : vector<9x256xf32> to vector<1x256xf32>
    %cst_20 = arith.constant 5.000000e-01 : f32
    %131 = vector.broadcast %cst_20 : f32 to vector<1x256xf32>
    %132 = arith.addf %130, %131 : vector<1x256xf32>
    %133 = math.floor %132 : vector<1x256xf32>
    %cst_21 = arith.constant 0.000000e+00 : f32
    %134 = vector.broadcast %cst_21 : f32 to vector<1x256xf32>
    %135 = arith.cmpf ogt, %133, %134 : vector<1x256xf32>
    %cst_22 = arith.constant 1.000000e+00 : f32
    %136 = vector.broadcast %cst_22 : f32 to vector<1x256xf32>
    %137 = arith.select %135, %133, %136 : vector<1x256xi1>, vector<1x256xf32>
    %138 = tpu.reciprocal %137 {approx = true} : vector<1x256xf32> -> vector<1x256xf32>
    %cst_23 = arith.constant 0.000000e+00 : f32
    %139 = vector.broadcast %cst_23 : f32 to vector<1x256xf32>
    %140 = arith.select %135, %138, %139 : vector<1x256xi1>, vector<1x256xf32>
    %141 = vector.broadcast %77 : vector<8x1xf32> to vector<8x256xf32>
    %142 = arith.addf %129, %141 : vector<8x256xf32>
    %cst_24 = arith.constant 0.000000e+00 : f32
    %143 = vector.broadcast %cst_24 : f32 to vector<8x256xf32>
    %144 = arith.maximumf %142, %143 : vector<8x256xf32>
    %145 = vector.broadcast %140 : vector<1x256xf32> to vector<8x256xf32>
    %146 = arith.mulf %144, %145 : vector<8x256xf32>
    %c0_25 = arith.constant 0 : index
    %c0_26 = arith.constant 0 : index
    %c0_27 = arith.constant 0 : index
    %147 = vector.load %arg8[%c0_25, %c0_26, %c0_27] : memref<1x8x256xf32, #tpu.memory_space<vmem>>, vector<1x8x256xf32>
    %148 = vector.shape_cast %147 : vector<1x8x256xf32> to vector<8x256xf32>
    %149 = vector.shape_cast %146 : vector<8x256xf32> to vector<1x8x256xf32>
    tpu.vector_store %arg8[%c0_25, %c0_26, %c0_27], %149 {strides = array<i32>} : memref<1x8x256xf32, #tpu.memory_space<vmem>>, vector<1x8x256xf32>,
    return
  }
  func.func @transform_0(%arg0: i32) -> (i32, i32, i32) {
    %c0_i32 = arith.constant 0 : i32
    %c0_i32_0 = arith.constant 0 : i32
    %c0_i32_1 = arith.constant 0 : i32
    return %arg0, %c0_i32, %c0_i32_0 : i32, i32, i32
  }
  func.func @transform_1(%arg0: i32) -> (i32, i32) {
    %c0_i32 = arith.constant 0 : i32
    %c0_i32_0 = arith.constant 0 : i32
    %c0_i32_1 = arith.constant 0 : i32
    return %c0_i32, %c0_i32_0 : i32, i32
  }
  func.func @transform_2(%arg0: i32) -> (i32, i32) {
    %c0_i32 = arith.constant 0 : i32
    %c0_i32_0 = arith.constant 0 : i32
    %c0_i32_1 = arith.constant 0 : i32
    return %c0_i32, %c0_i32_0 : i32, i32
  }
  func.func @transform_3(%arg0: i32) -> (i32, i32) {
    %c0_i32 = arith.constant 0 : i32
    %c0_i32_0 = arith.constant 0 : i32
    %c0_i32_1 = arith.constant 0 : i32
    return %c0_i32, %c0_i32_0 : i32, i32
  }
  func.func @transform_4(%arg0: i32) -> (i32, i32) {
    %c0_i32 = arith.constant 0 : i32
    %c0_i32_0 = arith.constant 0 : i32
    %c0_i32_1 = arith.constant 0 : i32
    return %c0_i32, %c0_i32_0 : i32, i32
  }
  func.func @transform_5(%arg0: i32) -> (i32, i32) {
    %c0_i32 = arith.constant 0 : i32
    %c0_i32_0 = arith.constant 0 : i32
    %c0_i32_1 = arith.constant 0 : i32
    return %c0_i32, %c0_i32_0 : i32, i32
  }
  func.func @transform_6(%arg0: i32) -> (i32, i32) {
    %c0_i32 = arith.constant 0 : i32
    %c0_i32_0 = arith.constant 0 : i32
    %c0_i32_1 = arith.constant 0 : i32
    return %c0_i32, %c0_i32_0 : i32, i32
  }
  func.func @transform_7(%arg0: i32) -> (i32, i32, i32) {
    %c0_i32 = arith.constant 0 : i32
    %c0_i32_0 = arith.constant 0 : i32
    %c0_i32_1 = arith.constant 0 : i32
    return %arg0, %c0_i32, %c0_i32_0 : i32, i32, i32
  }
}

</mosaic_0001>

<llo_original>
// kernel: tpu_custom_call.1
$region0: #{tpu_custom_call.1}
  #allocation0 [shape = 'u32[]', space=smem, size = 0x4, offset = 0x4, fixed_abs, tag = 'smem constant byte address 0x4 - core index']
  #allocation1 [shape = 'u32[144,128]{1,0:T(1,128)}', space=vmem, size = 0x12000, scoped, tag = 'internal scratch']
  %s0 = inlined_call_operand.vmem [shape: f32[2,5,256], index: 0, kind: input, shape index: {}]
  %s1 = inlined_call_operand.hbm [shape: f32[9,45], index: 1, kind: input, shape index: {}]
  %s2 = inlined_call_operand.vmem [shape: f32[8,1], index: 2, kind: input, shape index: {}]
  %s3 = inlined_call_operand.vmem [shape: f32[9,256], index: 3, kind: input, shape index: {}]
  %s4 = inlined_call_operand.vmem [shape: f32[9,81], index: 4, kind: input, shape index: {}]
  %s5 = inlined_call_operand.vmem [shape: f32[8,1], index: 5, kind: input, shape index: {}]
  %s6 = inlined_call_operand.vmem [shape: f32[9,256], index: 6, kind: input, shape index: {}]
  %s7 = inlined_call_operand.hbm [shape: f32[2,8,256], index: 7, kind: output, shape index: {}]
  %s8 = sld [smem:[#allocation0]]
  $region65: #{tpu_custom_call.1} parent=0
    _
  %s10 = ssub.s32 1, %s8
  %s11 = scalar_select 0, %s10, %s8
  $region1: #{tpu_custom_call.1} parent=0
    #allocation2 [shape = 'u8[8192]{0}', space=vmem, size = 0x2000, scoped, tag = 'input window, operand 1, single buffered']
    #allocation3 [shape = 's32[2]{0}', space=sflag, size = 0x8, scoped, tag = 'scoped memory for tpu_custom_call.1']
    #allocation4 [shape = 's32[2]{0}', space=sflag, size = 0x8, scoped, tag = 'scoped memory for tpu_custom_call.1']
    #allocation5 [shape = 'u8[16384]{0}', space=vmem, size = 0x4000, scoped, tag = 'output window, operand 0']
    %12 = vsyncpa [#allocation3], 0
    %13 = vsyncpa [#allocation4], 0
    %s14 = scalar_lea.sflag [#allocation4], 1
    %15 = vsyncpa %s14, 0
    loop: start=0, step=1, limit=4
    $region2: #{tpu_custom_call.1} parent=1 // loop_pre_header
      _
    $region3: #{tpu_custom_call.1} parent=1 // loop_header
      %s17 = sphi 0, %s21
      %p18 = scmp.ge.s32.totalorder %s17, 4
      %s27 = sphi 0, %s29
      %s30 = sphi 0, %s27
      %s31 = sphi 0, %s30
      %s47 = sphi 0, %s31
      %s51 = sphi 0, %s51
      %s53 = sphi 0, %s51
      %s54 = sphi 0, %s53
      %s68 = sphi 0, %s54
      %s72 = sphi 0, %s72
      %s74 = sphi 0, %s72
      %s75 = sphi 0, %s74
      %s89 = sphi 0, %s75
      %s93 = sphi 0, %s93
      %s95 = sphi 0, %s93
      %s96 = sphi 0, %s95
      %s110 = sphi 0, %s96
      %s114 = sphi 0, %s114
      %s116 = sphi 0, %s114
      %s117 = sphi 0, %s116
      %s131 = sphi 0, %s117
      %s135 = sphi 0, %s135
      %s137 = sphi 0, %s135
      %s138 = sphi 0, %s137
      %s152 = sphi 0, %s138
      %s156 = sphi 0, %s156
      %s158 = sphi 0, %s156
      %s159 = sphi 0, %s158
      %s173 = sphi 0, %s159
      %s179 = sphi 0, %s181
      %s182 = sphi 0, %s179
      %s183 = sphi 0, %s182
      %s199 = sphi 0, %s183
    $region4: #{tpu_custom_call.1} parent=1 // loop_header_branch
      %20 = sbr.rel (%p18) target = $region8
    $region5: #{tpu_custom_call.1} parent=1 // loop_body
      %s22 = ssub.s32 %s17, 1
      %s23 = ssub.s32 %s17, 2
      %s24 = sadd.s32 %s17, 1
      %s25 = ssub.s32 %s17, %s24
      %p26 = scmp.eq.s32.totalorder %s25, 0
      %s28 = sadd.s32 %s27, 1
      %s29 = scalar_select %p26, %s27, %s28
      %p32 = pneg %p26
      %p33 = scmp.eq.s32.totalorder %s17, 1
      %p34 = por %p32, %p33
      %p35 = scmp.ne.s32.totalorder %s27, %s30
      %p36 = scmp.eq.s32.totalorder %s17, 0
      %p37 = por %p35, %p36
      %p38 = scmp.ne.s32.totalorder %s27, %s30
      %p39 = scmp.eq.s32.totalorder %s22, 1
      %p40 = por %p38, %p39
      %p41 = scmp.ne.s32.totalorder %s30, %s31
      %p42 = scmp.eq.s32.totalorder %s22, 0
      %p43 = por %p41, %p42
      %p44 = scmp.ne.s32.totalorder %s30, %s31
      %p45 = scmp.eq.s32.totalorder %s23, 1
      %p46 = por %p44, %p45
      %p48 = scmp.ne.s32.totalorder %s31, %s47
      %p49 = scmp.eq.s32.totalorder %s23, 0
      %p50 = por %p48, %p49
      %s52 = sadd.s32 %s51, 1
      %p55 = scmp.eq.s32.totalorder %s17, 1
      %p56 = scmp.ne.s32.totalorder %s51, %s53
      %p57 = scmp.eq.s32.totalorder %s17, 0
      %p58 = por %p56, %p57
      %p59 = scmp.ne.s32.totalorder %s51, %s53
      %p60 = scmp.eq.s32.totalorder %s22, 1
      %p61 = por %p59, %p60
      %p62 = scmp.ne.s32.totalorder %s53, %s54
      %p63 = scmp.eq.s32.totalorder %s22, 0
      %p64 = por %p62, %p63
      %p65 = scmp.ne.s32.totalorder %s53, %s54
      %p66 = scmp.eq.s32.totalorder %s23, 1
      %p67 = por %p65, %p66
      %p69 = scmp.ne.s32.totalorder %s54, %s68
      %p70 = scmp.eq.s32.totalorder %s23, 0
      %p71 = por %p69, %p70
      %s73 = sadd.s32 %s72, 1
      %p76 = scmp.eq.s32.totalorder %s17, 1
      %p77 = scmp.ne.s32.totalorder %s72, %s74
      %p78 = scmp.eq.s32.totalorder %s17, 0
      %p79 = por %p77, %p78
      %p80 = scmp.ne.s32.totalorder %s72, %s74
      %p81 = scmp.eq.s32.totalorder %s22, 1
      %p82 = por %p80, %p81
      %p83 = scmp.ne.s32.totalorder %s74, %s75
      %p84 = scmp.eq.s32.totalorder %s22, 0
      %p85 = por %p83, %p84
      %p86 = scmp.ne.s32.totalorder %s74, %s75
      %p87 = scmp.eq.s32.totalorder %s23, 1
      %p88 = por %p86, %p87
      %p90 = scmp.ne.s32.totalorder %s75, %s89
      %p91 = scmp.eq.s32.totalorder %s23, 0
      %p92 = por %p90, %p91
      %s94 = sadd.s32 %s93, 1
      %p97 = scmp.eq.s32.totalorder %s17, 1
      %p98 = scmp.ne.s32.totalorder %s93, %s95
      %p99 = scmp.eq.s32.totalorder %s17, 0
      %p100 = por %p98, %p99
      %p101 = scmp.ne.s32.totalorder %s93, %s95
      %p102 = scmp.eq.s32.totalorder %s22, 1
      %p103 = por %p101, %p102
      %p104 = scmp.ne.s32.totalorder %s95, %s96
      %p105 = scmp.eq.s32.totalorder %s22, 0
      %p106 = por %p104, %p105
      %p107 = scmp.ne.s32.totalorder %s95, %s96
      %p108 = scmp.eq.s32.totalorder %s23, 1
      %p109 = por %p107, %p108
      %p111 = scmp.ne.s32.totalorder %s96, %s110
      %p112 = scmp.eq.s32.totalorder %s23, 0
      %p113 = por %p111, %p112
      %s115 = sadd.s32 %s114, 1
      %p118 = scmp.eq.s32.totalorder %s17, 1
      %p119 = scmp.ne.s32.totalorder %s114, %s116
      %p120 = scmp.eq.s32.totalorder %s17, 0
      %p121 = por %p119, %p120
      %p122 = scmp.ne.s32.totalorder %s114, %s116
      %p123 = scmp.eq.s32.totalorder %s22, 1
      %p124 = por %p122, %p123
      %p125 = scmp.ne.s32.totalorder %s116, %s117
      %p126 = scmp.eq.s32.totalorder %s22, 0
      %p127 = por %p125, %p126
      %p128 = scmp.ne.s32.totalorder %s116, %s117
      %p129 = scmp.eq.s32.totalorder %s23, 1
      %p130 = por %p128, %p129
      %p132 = scmp.ne.s32.totalorder %s117, %s131
      %p133 = scmp.eq.s32.totalorder %s23, 0
      %p134 = por %p132, %p133
      %s136 = sadd.s32 %s135, 1
      %p139 = scmp.eq.s32.totalorder %s17, 1
      %p140 = scmp.ne.s32.totalorder %s135, %s137
      %p141 = scmp.eq.s32.totalorder %s17, 0
      %p142 = por %p140, %p141
      %p143 = scmp.ne.s32.totalorder %s135, %s137
      %p144 = scmp.eq.s32.totalorder %s22, 1
      %p145 = por %p143, %p144
      %p146 = scmp.ne.s32.totalorder %s137, %s138
      %p147 = scmp.eq.s32.totalorder %s22, 0
      %p148 = por %p146, %p147
      %p149 = scmp.ne.s32.totalorder %s137, %s138
      %p150 = scmp.eq.s32.totalorder %s23, 1
      %p151 = por %p149, %p150
      %p153 = scmp.ne.s32.totalorder %s138, %s152
      %p154 = scmp.eq.s32.totalorder %s23, 0
      %p155 = por %p153, %p154
      %s157 = sadd.s32 %s156, 1
      %p160 = scmp.eq.s32.totalorder %s17, 1
      %p161 = scmp.ne.s32.totalorder %s156, %s158
      %p162 = scmp.eq.s32.totalorder %s17, 0
      %p163 = por %p161, %p162
      %p164 = scmp.ne.s32.totalorder %s156, %s158
      %p165 = scmp.eq.s32.totalorder %s22, 1
      %p166 = por %p164, %p165
      %p167 = scmp.ne.s32.totalorder %s158, %s159
      %p168 = scmp.eq.s32.totalorder %s22, 0
      %p169 = por %p167, %p168
      %p170 = scmp.ne.s32.totalorder %s158, %s159
      %p171 = scmp.eq.s32.totalorder %s23, 1
      %p172 = por %p170, %p171
      %p174 = scmp.ne.s32.totalorder %s159, %s173
      %p175 = scmp.eq.s32.totalorder %s23, 0
      %p176 = por %p174, %p175
      %s177 = ssub.s32 %s17, %s24
      %p178 = scmp.eq.s32.totalorder %s177, 0
      %s180 = sadd.s32 %s179, 1
      %s181 = scalar_select %p178, %s179, %s180
      %p184 = pneg %p178
      %p185 = scmp.eq.s32.totalorder %s17, 1
      %p186 = por %p184, %p185
      %p187 = scmp.ne.s32.totalorder %s179, %s182
      %p188 = scmp.eq.s32.totalorder %s17, 0
      %p189 = por %p187, %p188
      %p190 = scmp.ne.s32.totalorder %s179, %s182
      %p191 = scmp.eq.s32.totalorder %s22, 1
      %p192 = por %p190, %p191
      %p193 = scmp.ne.s32.totalorder %s182, %s183
      %p194 = scmp.eq.s32.totalorder %s22, 0
      %p195 = por %p193, %p194
      %p196 = scmp.ne.s32.totalorder %s182, %s183
      %p197 = scmp.eq.s32.totalorder %s23, 1
      %p198 = por %p196, %p197
      %p200 = scmp.ne.s32.totalorder %s183, %s199
      %p201 = scmp.eq.s32.totalorder %s23, 0
      %p202 = por %p200, %p201
      %p203 = scmp.le.s32.totalorder 1, %s17
      %p204 = scmp.lt.s32.totalorder %s17, 3
      %p205 = pnand %p203, %p204
      %p206 = pneg %p205
      // Predicated region
      $region9: #{tpu_custom_call.1} parent=5 // pred_check
        _
      $region10: #{tpu_custom_call.1} parent=5 // pred_check_branch
        %208 = sbr.rel (%p205) target = $region12
      $region11: #{tpu_custom_call.1} parent=5 // pred_region
        %s209 = ssub.s32 %s17, 1
        // Predicated region
        $region13: #{tpu_custom_call.1} parent=11 // pred_check
          %p210 = pneg %p64
        $region14: #{tpu_custom_call.1} parent=11 // pred_check_branch
          %212 = sbr.rel (%p210) target = $region16
        $region15: #{tpu_custom_call.1} parent=11 // pred_region
          %s214 = ssub.s32 256, 256
          %215 = vsyncadd [#allocation3], %s214
          %s216 = sshll.u32 [#allocation2], 4
          %s217 = int_to_ptr.vmem [resolvable:$true] %s216
          %222 = dma.hbm_to_vmem [thread:$0]  %s1, 256, %s217, [#allocation3], 128, 128, 8
        $region16: #{tpu_custom_call.1} parent=11 // pred_fallthru
          _
        // Predicated region
        $region17: #{tpu_custom_call.1} parent=11 // pred_check
          %p223 = pneg %p85
        $region18: #{tpu_custom_call.1} parent=11 // pred_check_branch
          %225 = sbr.rel (%p223) target = $region20
        $region19: #{tpu_custom_call.1} parent=11 // pred_region
          _
        $region20: #{tpu_custom_call.1} parent=11 // pred_fallthru
          _
        // Predicated region
        $region21: #{tpu_custom_call.1} parent=11 // pred_check
          %p226 = pneg %p106
        $region22: #{tpu_custom_call.1} parent=11 // pred_check_branch
          %228 = sbr.rel (%p226) target = $region24
        $region23: #{tpu_custom_call.1} parent=11 // pred_region
          _
        $region24: #{tpu_custom_call.1} parent=11 // pred_fallthru
          _
        // Predicated region
        $region25: #{tpu_custom_call.1} parent=11 // pred_check
          %p229 = pneg %p127
        $region26: #{tpu_custom_call.1} parent=11 // pred_check_branch
          %231 = sbr.rel (%p229) target = $region28
        $region27: #{tpu_custom_call.1} parent=11 // pred_region
          _
        $region28: #{tpu_custom_call.1} parent=11 // pred_fallthru
          _
        // Predicated region
        $region29: #{tpu_custom_call.1} parent=11 // pred_check
          %p232 = pneg %p148
        $region30: #{tpu_custom_call.1} parent=11 // pred_check_branch
          %234 = sbr.rel (%p232) target = $region32
        $region31: #{tpu_custom_call.1} parent=11 // pred_region
          _
        $region32: #{tpu_custom_call.1} parent=11 // pred_fallthru
          _
        // Predicated region
        $region33: #{tpu_custom_call.1} parent=11 // pred_check
          %p235 = pneg %p169
        $region34: #{tpu_custom_call.1} parent=11 // pred_check_branch
          %237 = sbr.rel (%p235) target = $region36
        $region35: #{tpu_custom_call.1} parent=11 // pred_region
          _
        $region36: #{tpu_custom_call.1} parent=11 // pred_fallthru
          _
      $region12: #{tpu_custom_call.1} parent=5 // pred_fallthru
        _
      %p238 = scmp.lt.s32.totalorder %s17, 2
      // Predicated region
      $region37: #{tpu_custom_call.1} parent=5 // pred_check
        %p239 = pneg %p238
      $region38: #{tpu_custom_call.1} parent=5 // pred_check_branch
        %241 = sbr.rel (%p239) target = $region40
      $region39: #{tpu_custom_call.1} parent=5 // pred_region
        // Predicated region
        $region41: #{tpu_custom_call.1} parent=39 // pred_check
          %p242 = pneg %p37
        $region42: #{tpu_custom_call.1} parent=39 // pred_check_branch
          %244 = sbr.rel (%p242) target = $region44
        $region43: #{tpu_custom_call.1} parent=39 // pred_region
          %p245 = scmp.lt.s32.totalorder %s17, 1
          %s246 = scalar_select %p245, %s17, 1
          %s247 = smul.addr %s246, 2
          %s248 = smul.addr %s247, 8
          %s249 = scalar_lea.vmem %s0, %s248
        $region44: #{tpu_custom_call.1} parent=39 // pred_fallthru
          _
      $region40: #{tpu_custom_call.1} parent=5 // pred_fallthru
        _
      %p250 = scmp.le.s32.totalorder 1, %s17
      %p251 = scmp.lt.s32.totalorder %s17, 3
      %p252 = pnand %p250, %p251
      %p253 = pneg %p252
      // Predicated region
      $region45: #{tpu_custom_call.1} parent=5 // pred_check
        _
      $region46: #{tpu_custom_call.1} parent=5 // pred_check_branch
        %255 = sbr.rel (%p252) target = $region48
      $region47: #{tpu_custom_call.1} parent=5 // pred_region
        %s256 = ssub.s32 %s17, 1
        // Predicated region
        $region49: #{tpu_custom_call.1} parent=47 // pred_check
          %p257 = pneg %p64
        $region50: #{tpu_custom_call.1} parent=47 // pred_check_branch
          %259 = sbr.rel (%p257) target = $region52
        $region51: #{tpu_custom_call.1} parent=47 // pred_region
          %260 = dma.done [#allocation3], 256
        $region52: #{tpu_custom_call.1} parent=47 // pred_fallthru
          _
        %p261 = scmp.lt.s32.totalorder %s22, 1
        %s262 = scalar_select %p261, %s22, 1
        %s263 = smul.addr %s262, 2
        %s264 = smul.addr %s263, 8
        %s265 = scalar_lea.vmem %s0, %s264
        %p266 = pneg %p43
        %p267 = pneg %p40
        %p268 = pneg %p64
        %p269 = pneg %p61
        %p270 = pneg %p85
        %p271 = pneg %p82
        %p272 = pneg %p106
        %p273 = pneg %p103
        %p274 = pneg %p127
        %p275 = pneg %p124
        %p276 = pneg %p148
        %p277 = pneg %p145
        %p278 = pneg %p169
        %p279 = pneg %p166
        %p280 = pneg %p195
        %p281 = pneg %p192
        %s282 = sand.u32 %s182, 1
        %s283 = scalar_lea.sflag [#allocation4], %s282
        %s284 = sand.u32 %s182, 1
        %s285 = smul.addr %s284, 16
        %s286 = scalar_lea.vmem [#allocation5], %s285
        %p287 = scmp.lt.s32.totalorder %s22, 1
        %s288 = scalar_select %p287, %s22, 1
        %s289 = smul.addr %s288, 2
        %s290 = smul.addr %s289, 8
        %s291 = scalar_lea.vmem %s0, %s290
        %v292 = vld [vmem:[%s291] sm:$0x1f]
        %v293 = vld [vmem:[%s291 + $0x8] sm:$0x1f]
        %v294 = vld [vmem:[#allocation2] sm:$0xff]
        %v295 = vld [vmem:[#allocation2 + $0x8] sm:$0x1]
        %v296 = vld [vmem:[%s2] sm:$0xff]
        %v297 = vld [vmem:[%s3] sm:$0xff]
        %v298 = vld [vmem:[%s3 + $0x8] sm:$0xff]
        %v299 = vld [vmem:[%s3 + $0x10] sm:$0x1]
        %v300 = vld [vmem:[%s3 + $0x18] sm:$0x1]
        %302 = vrot.lane.b32.xlu0 %v293, 17
        %v303 = vpop.permute.xlu0 %302
        %306 = vrot.lane.b32.xlu0 %v292, 17
        %v307 = vpop.permute.xlu0 %306
        %vm308 = vcmask 138240
        %v309 = vsel %vm308, %v307, %v303
        %v312 = vsel %vm308, %v303, %v307
        %v313 = vlaneseq
        %v314 = vshrl.u32 %v313, 7
        %v315 = vsub.s32 0, %v314
        %v316 = vrot.slane %v297, %v315
        %v317 = vlaneseq
        %v318 = vshrl.u32 %v317, 7
        %v319 = vsub.s32 0, %v318
        %v320 = vrot.slane %v298, %v319
        %v321 = vmul.f32 %v312, %v316
        %v322 = vmul.f32 %v309, %v320
        %323 = vrot.lane.b32.xlu0 %v293, 16
        %v324 = vpop.permute.xlu0 %323
        %326 = vrot.lane.b32.xlu0 %v292, 16
        %v327 = vpop.permute.xlu0 %326
        %vm328 = vcmask 130048
        %v329 = vsel %vm328, %v327, %v324
        %v332 = vsel %vm328, %v324, %v327
        %v333 = vlaneseq
        %v334 = vshrl.u32 %v333, 7
        %v335 = vsub.s32 1, %v334
        %v336 = vrot.slane %v297, %v335
        %v337 = vlaneseq
        %v338 = vshrl.u32 %v337, 7
        %v339 = vsub.s32 1, %v338
        %v340 = vrot.slane %v298, %v339
        %v341 = vmul.f32 %v332, %v336
        %v342 = vmul.f32 %v329, %v340
        %343 = vrot.lane.b32.xlu0 %v293, 15
        %v344 = vpop.permute.xlu0 %343
        %346 = vrot.lane.b32.xlu0 %v292, 15
        %v347 = vpop.permute.xlu0 %346
        %vm348 = vcmask 121856
        %v349 = vsel %vm348, %v347, %v344
        %v352 = vsel %vm348, %v344, %v347
        %v353 = vlaneseq
        %v354 = vshrl.u32 %v353, 7
        %v355 = vsub.s32 2, %v354
        %v356 = vrot.slane %v297, %v355
        %v357 = vlaneseq
        %v358 = vshrl.u32 %v357, 7
        %v359 = vsub.s32 2, %v358
        %v360 = vrot.slane %v298, %v359
        %v361 = vmul.f32 %v352, %v356
        %v362 = vmul.f32 %v349, %v360
        %363 = vrot.lane.b32.xlu0 %v293, 1
        %v364 = vpop.permute.xlu0 %363
        %366 = vrot.lane.b32.xlu0 %v292, 1
        %v367 = vpop.permute.xlu0 %366
        %vm368 = vcmask 7168
        %v369 = vsel %vm368, %v367, %v364
        %v372 = vsel %vm368, %v364, %v367
        %v373 = vlaneseq
        %v374 = vshrl.u32 %v373, 7
        %v375 = vsub.s32 3, %v374
        %v376 = vrot.slane %v297, %v375
        %v377 = vlaneseq
        %v378 = vshrl.u32 %v377, 7
        %v379 = vsub.s32 3, %v378
        %v380 = vrot.slane %v298, %v379
        %v381 = vmul.f32 %v372, %v376
        %v382 = vmul.f32 %v369, %v380
        %383 = vrot.lane.b32.xlu0 %v292, 127
        %v384 = vpop.permute.xlu0 %383
        %385 = vrot.lane.b32.xlu0 %v293, 127
        %v386 = vpop.permute.xlu0 %385
        %vm387 = vcmask 1039360
        %v388 = vsel %vm387, %v384, %v386
        %v392 = vsel %vm387, %v386, %v384
        %v393 = vlaneseq
        %v394 = vshrl.u32 %v393, 7
        %v395 = vsub.s32 5, %v394
        %v396 = vrot.slane %v297, %v395
        %v397 = vlaneseq
        %v398 = vshrl.u32 %v397, 7
        %v399 = vsub.s32 5, %v398
        %v400 = vrot.slane %v298, %v399
        %v401 = vmul.f32 %v388, %v396
        %v402 = vmul.f32 %v392, %v400
        %403 = vrot.lane.b32.xlu0 %v292, 113
        %v404 = vpop.permute.xlu0 %403
        %405 = vrot.lane.b32.xlu0 %v293, 113
        %v406 = vpop.permute.xlu0 %405
        %vm407 = vcmask 924672
        %v408 = vsel %vm407, %v404, %v406
        %v412 = vsel %vm407, %v406, %v404
        %v413 = vlaneseq
        %v414 = vshrl.u32 %v413, 7
        %v415 = vsub.s32 6, %v414
        %v416 = vrot.slane %v297, %v415
        %v417 = vlaneseq
        %v418 = vshrl.u32 %v417, 7
        %v419 = vsub.s32 6, %v418
        %v420 = vrot.slane %v298, %v419
        %v421 = vmul.f32 %v408, %v416
        %v422 = vmul.f32 %v412, %v420
        %423 = vrot.lane.b32.xlu0 %v292, 112
        %v424 = vpop.permute.xlu0 %423
        %425 = vrot.lane.b32.xlu0 %v293, 112
        %v426 = vpop.permute.xlu0 %425
        %vm427 = vcmask 916480
        %v428 = vsel %vm427, %v424, %v426
        %v432 = vsel %vm427, %v426, %v424
        %v433 = vlaneseq
        %v434 = vshrl.u32 %v433, 7
        %v435 = vsub.s32 7, %v434
        %v436 = vrot.slane %v297, %v435
        %v437 = vlaneseq
        %v438 = vshrl.u32 %v437, 7
        %v439 = vsub.s32 7, %v438
        %v440 = vrot.slane %v298, %v439
        %v441 = vmul.f32 %v428, %v436
        %v442 = vmul.f32 %v432, %v440
        %443 = vrot.lane.b32.xlu0 %v292, 111
        %v444 = vpop.permute.xlu0 %443
        %445 = vrot.lane.b32.xlu0 %v293, 111
        %v446 = vpop.permute.xlu0 %445
        %vm447 = vcmask 908288
        %v448 = vsel %vm447, %v444, %v446
        %v452 = vsel %vm447, %v446, %v444
        %v453 = vlaneseq
        %v454 = vshrl.u32 %v453, 7
        %v455 = vsub.s32 0, %v454
        %v456 = vrot.slane %v299, %v455
        %v457 = vlaneseq
        %v458 = vshrl.u32 %v457, 7
        %v459 = vsub.s32 0, %v458
        %v460 = vrot.slane %v300, %v459
        %v461 = vmul.f32 %v448, %v456
        %v462 = vmul.f32 %v452, %v460
        %v465 = vrot.slane %v341, 3
        %v466 = vrot.slane %v342, 3
        %v471 = vrot.slane %v361, 6
        %v472 = vrot.slane %v362, 6
        %v477 = vrot.slane %v381, 1
        %v478 = vrot.slane %v382, 1
        %v481 = vrot.slane %v292, 4
        %v482 = vrot.slane %v293, 4
        %v487 = vrot.slane %v401, 7
        %v488 = vrot.slane %v402, 7
        %v493 = vrot.slane %v421, 2
        %v494 = vrot.slane %v422, 2
        %v499 = vrot.slane %v441, 5
        %v500 = vrot.slane %v442, 5
        %vm503 = vcmask 1044480
        %v504 = vsel %vm503, %v321, %v465
        %v505 = vsel %vm503, %v322, %v466
        %vm506 = vcmask 1041408
        %v507 = vsel %vm506, %v465, %v471
        %v508 = vsel %vm506, %v466, %v472
        %vm509 = vcmask 1046528
        %v510 = vsel %vm509, %v507, %v477
        %v511 = vsel %vm509, %v508, %v478
        %vm512 = vcmask 1043456
        %v513 = vsel %vm512, %v477, %v481
        %v514 = vsel %vm512, %v478, %v482
        %vm515 = vcmask 1040384
        %v516 = vsel %vm515, %v481, %v487
        %v517 = vsel %vm515, %v482, %v488
        %vm518 = vcmask 1045504
        %v519 = vsel %vm518, %v516, %v493
        %v520 = vsel %vm518, %v517, %v494
        %vm521 = vcmask 1042432
        %v522 = vsel %vm521, %v493, %v499
        %v523 = vsel %vm521, %v494, %v500
        %vm524 = vcmask 367616
        %v526 = vsel %vm524, %v294, 0
        %v529 = vsel %vm524, %v295, 0
        %v532 = vsel %vm503, %v461, 0
        %v535 = vsel %vm503, %v462, 0
        %537 = vmatprep.subr.mxu0 %v505
        %538 = vmatpush1.msra.mxu0 %v504
        %539 = vmatprep.subr.mxu0 %v511
        %540 = vmatpush1.msra.mxu0 %v510
        %541 = vmatprep.subr.mxu0 %v514
        %542 = vmatpush1.msra.mxu0 %v513
        %543 = vmatprep.subr.mxu0 %v520
        %544 = vmatpush1.msra.mxu0 %v519
        %545 = vmatprep.subr.mxu0 %v523
        %546 = vmatpush1.msra.mxu0 %v522
        %547 = vmatprep.subr.mxu0 %v535
        %548 = vmatpush1.msra.mxu0 %v532
        %549 = vmatprep.subr.mxu0 0.0
        %550 = vmatpush1.msra.mxu0 0.0
        %551 = vmatprep.subr.mxu0 0.0
        %552 = vmatpush1.msra.mxu0 0.0
        %553 = vmatprep.subr.mxu0 0.0
        %554 = vmatpush1.msra.mxu0 0.0
        %555 = vmatprep.subr.mxu0 0.0
        %556 = vmatpush1.msra.mxu0 0.0
        %557 = vmatprep.subr.mxu0 0.0
        %558 = vmatpush1.msra.mxu0 0.0
        %559 = vmatprep.subr.mxu0 0.0
        %560 = vmatpush1.msra.mxu0 0.0
        %561 = vmatprep.subr.mxu0 0.0
        %562 = vmatpush1.msra.mxu0 0.0
        %563 = vmatprep.subr.mxu0 0.0
        %564 = vmatpush1.msra.mxu0 0.0
        %565 = vmatprep.subr.mxu0 0.0
        %566 = vmatpush1.msra.mxu0 0.0
        %567 = vmatprep.subr.mxu0 0.0
        %568 = vmatpush1.msra.mxu0 0.0
        %569 = vmatprep.subr.mxu0 0.0
        %570 = vmatpush1.msra.mxu0 0.0
        %571 = vmatprep.subr.mxu0 0.0
        %572 = vmatpush1.msra.mxu0 0.0
        %573 = vmatprep.subr.mxu0 0.0
        %574 = vmatpush1.msra.mxu0 0.0
        %575 = vmatprep.subr.mxu0 0.0
        %576 = vmatpush1.msra.mxu0 0.0
        %577 = vmatprep.subr.mxu0 0.0
        %578 = vmatpush1.msra.mxu0 0.0
        %579 = vmatprep.subr.mxu0 0.0
        %580 = vmatpush1.msra.mxu0 0.0
        %581 = vmatprep.subr.mxu0 0.0
        %582 = vmatpush1.msra.mxu0 0.0
        %583 = vmatprep.subr.mxu0 0.0
        %584 = vmatpush1.msra.mxu0 0.0
        %585 = vmatprep.subr.mxu0 0.0
        %586 = vmatpush1.msra.mxu0 0.0
        %587 = vmatprep.subr.mxu0 0.0
        %588 = vmatpush1.msra.mxu0 0.0
        %589 = vmatprep.subr.mxu0 0.0
        %590 = vmatpush1.msra.mxu0 0.0
        %591 = vmatprep.subr.mxu0 0.0
        %592 = vmatpush1.msra.mxu0 0.0
        %593 = vmatprep.subr.mxu0 0.0
        %594 = vmatpush1.msra.mxu0 0.0
        %595 = vmatprep.subr.mxu0 0.0
        %596 = vmatpush1.msra.mxu0 0.0
        %597 = vmatprep.subr.mxu0 0.0
        %598 = vmatpush1.msra.mxu0 0.0
        %599 = vmatprep.subr.mxu0 0.0
        %600 = vmatpush1.msra.mxu0 0.0
        %601 = vmatprep.mubr.f32.mxu0 0.0
        %602 = vmatmul.mubr.f32.gmra.mrb[0].mxu0 %v526
        %v603 = vpop.f32.mrb[0].mxu0
        %v604 = vadd.f32 0.0, %v603
        %v605 = vpop.f32.mrb[0].mxu0
        %v606 = vadd.f32 0.0, %v605
        %607 = vmatprep.mubr.f32.mxu0 0.0
        %608 = vmatmul.mubr.f32.gmra.mrb[0].mxu0 %v529
        %v609 = vpop.f32.mrb[0].mxu0
        %v610 = vadd.f32 0.0, %v609
        %v611 = vpop.f32.mrb[0].mxu0
        %v612 = vadd.f32 0.0, %v611
        %613 = vdwg.mxu0
        %v614 = vadd.f32 %v610, 0.5
        %v615 = vadd.f32 %v612, 0.5
        %v616 = vfloor.f32 %v614
        %v617 = vfloor.f32 %v615
        %vm618 = vcmp.gt.f32.partialorder %v616, 0.0
        %vm619 = vcmp.gt.f32.partialorder %v617, 0.0
        %v620 = vsel %vm618, %v616, 1.0
        %v621 = vsel %vm619, %v617, 1.0
        %v622 = vrcp.pop %v620
        %v623 = vrcp.pop %v621
        %v624 = vsel %vm618, %v622, 0.0
        %v625 = vsel %vm619, %v623, 0.0
        %627 = vset.pattern.permute.xlu0 0
        %628 = vperm.xlu0 %627, %v296
        %v629 = vpop.permute.xlu0 %628
        %v631 = vadd.f32 %v604, %v629
        %v632 = vadd.f32 %v606, %v629
        %v633 = vmax.f32 %v631, 0.0
        %v634 = vmax.f32 %v632, 0.0
        %v635 = vlaneseq
        %v636 = vshrl.u32 %v635, 7
        %v637 = vsub.s32 0, %v636
        %v638 = vrot.slane %v624, %v637
        %v639 = vlaneseq
        %v640 = vshrl.u32 %v639, 7
        %v641 = vsub.s32 0, %v640
        %v642 = vrot.slane %v625, %v641
        %v643 = vmul.f32 %v633, %v638
        %v644 = vmul.f32 %v634, %v642
        %v645 = vsel %vm618, 1, 0
        %v646 = vsel %vm619, 1, 0
        %v647 = vcvt.s32.f32 %v645
        %v648 = vcvt.s32.f32 %v646
        %v649 = vld [vmem:[%s4] sm:$0xff]
        %v650 = vld [vmem:[%s4 + $0x8] sm:$0x1]
        %v651 = vld [vmem:[%s5] sm:$0xff]
        %v652 = vld [vmem:[%s6] sm:$0xff]
        %v653 = vld [vmem:[%s6 + $0x8] sm:$0xff]
        %v654 = vld [vmem:[%s6 + $0x10] sm:$0x1]
        %v655 = vld [vmem:[%s6 + $0x18] sm:$0x1]
        %658 = vrot.lane.b32.xlu0 %v644, 17
        %v659 = vpop.permute.xlu0 %658
        %660 = vrot.lane.b32.xlu0 %v648, 17
        %v661 = vpop.permute.xlu0 %660
        %666 = vrot.lane.b32.xlu0 %v643, 17
        %v667 = vpop.permute.xlu0 %666
        %668 = vrot.lane.b32.xlu0 %v647, 17
        %v669 = vpop.permute.xlu0 %668
        %v670 = vsel %vm308, %v667, %v659
        %v671 = vsel %vm308, %v669, %v661
        %v676 = vsel %vm308, %v659, %v667
        %v677 = vsel %vm308, %v661, %v669
        %v678 = vlaneseq
        %v679 = vshrl.u32 %v678, 7
        %v680 = vsub.s32 0, %v679
        %v681 = vrot.slane %v652, %v680
        %v682 = vlaneseq
        %v683 = vshrl.u32 %v682, 7
        %v684 = vsub.s32 0, %v683
        %v685 = vrot.slane %v653, %v684
        %v686 = vmul.f32 %v676, %v681
        %v687 = vmul.f32 %v670, %v685
        %v688 = vmul.f32 %v677, %v681
        %v689 = vmul.f32 %v671, %v685
        %690 = vrot.lane.b32.xlu0 %v644, 16
        %v691 = vpop.permute.xlu0 %690
        %692 = vrot.lane.b32.xlu0 %v648, 16
        %v693 = vpop.permute.xlu0 %692
        %696 = vrot.lane.b32.xlu0 %v643, 16
        %v697 = vpop.permute.xlu0 %696
        %698 = vrot.lane.b32.xlu0 %v647, 16
        %v699 = vpop.permute.xlu0 %698
        %v700 = vsel %vm328, %v697, %v691
        %v701 = vsel %vm328, %v699, %v693
        %v706 = vsel %vm328, %v691, %v697
        %v707 = vsel %vm328, %v693, %v699
        %v708 = vlaneseq
        %v709 = vshrl.u32 %v708, 7
        %v710 = vsub.s32 1, %v709
        %v711 = vrot.slane %v652, %v710
        %v712 = vlaneseq
        %v713 = vshrl.u32 %v712, 7
        %v714 = vsub.s32 1, %v713
        %v715 = vrot.slane %v653, %v714
        %v716 = vmul.f32 %v706, %v711
        %v717 = vmul.f32 %v700, %v715
        %v718 = vmul.f32 %v707, %v711
        %v719 = vmul.f32 %v701, %v715
        %720 = vrot.lane.b32.xlu0 %v644, 15
        %v721 = vpop.permute.xlu0 %720
        %722 = vrot.lane.b32.xlu0 %v648, 15
        %v723 = vpop.permute.xlu0 %722
        %726 = vrot.lane.b32.xlu0 %v643, 15
        %v727 = vpop.permute.xlu0 %726
        %728 = vrot.lane.b32.xlu0 %v647, 15
        %v729 = vpop.permute.xlu0 %728
        %v730 = vsel %vm348, %v727, %v721
        %v731 = vsel %vm348, %v729, %v723
        %v736 = vsel %vm348, %v721, %v727
        %v737 = vsel %vm348, %v723, %v729
        %v738 = vlaneseq
        %v739 = vshrl.u32 %v738, 7
        %v740 = vsub.s32 2, %v739
        %v741 = vrot.slane %v652, %v740
        %v742 = vlaneseq
        %v743 = vshrl.u32 %v742, 7
        %v744 = vsub.s32 2, %v743
        %v745 = vrot.slane %v653, %v744
        %v746 = vmul.f32 %v736, %v741
        %v747 = vmul.f32 %v730, %v745
        %v748 = vmul.f32 %v737, %v741
        %v749 = vmul.f32 %v731, %v745
        %750 = vrot.lane.b32.xlu0 %v644, 1
        %v751 = vpop.permute.xlu0 %750
        %752 = vrot.lane.b32.xlu0 %v648, 1
        %v753 = vpop.permute.xlu0 %752
        %756 = vrot.lane.b32.xlu0 %v643, 1
        %v757 = vpop.permute.xlu0 %756
        %758 = vrot.lane.b32.xlu0 %v647, 1
        %v759 = vpop.permute.xlu0 %758
        %v760 = vsel %vm368, %v757, %v751
        %v761 = vsel %vm368, %v759, %v753
        %v766 = vsel %vm368, %v751, %v757
        %v767 = vsel %vm368, %v753, %v759
        %v768 = vlaneseq
        %v769 = vshrl.u32 %v768, 7
        %v770 = vsub.s32 3, %v769
        %v771 = vrot.slane %v652, %v770
        %v772 = vlaneseq
        %v773 = vshrl.u32 %v772, 7
        %v774 = vsub.s32 3, %v773
        %v775 = vrot.slane %v653, %v774
        %v776 = vmul.f32 %v766, %v771
        %v777 = vmul.f32 %v760, %v775
        %v778 = vmul.f32 %v767, %v771
        %v779 = vmul.f32 %v761, %v775
        %780 = vrot.lane.b32.xlu0 %v643, 127
        %v781 = vpop.permute.xlu0 %780
        %782 = vrot.lane.b32.xlu0 %v644, 127
        %v783 = vpop.permute.xlu0 %782
        %784 = vrot.lane.b32.xlu0 %v647, 127
        %v785 = vpop.permute.xlu0 %784
        %786 = vrot.lane.b32.xlu0 %v648, 127
        %v787 = vpop.permute.xlu0 %786
        %v788 = vsel %vm387, %v781, %v783
        %v789 = vsel %vm387, %v785, %v787
        %v796 = vsel %vm387, %v783, %v781
        %v797 = vsel %vm387, %v787, %v785
        %v798 = vlaneseq
        %v799 = vshrl.u32 %v798, 7
        %v800 = vsub.s32 5, %v799
        %v801 = vrot.slane %v652, %v800
        %v802 = vlaneseq
        %v803 = vshrl.u32 %v802, 7
        %v804 = vsub.s32 5, %v803
        %v805 = vrot.slane %v653, %v804
        %v806 = vmul.f32 %v788, %v801
        %v807 = vmul.f32 %v796, %v805
        %v808 = vmul.f32 %v789, %v801
        %v809 = vmul.f32 %v797, %v805
        %810 = vrot.lane.b32.xlu0 %v643, 113
        %v811 = vpop.permute.xlu0 %810
        %812 = vrot.lane.b32.xlu0 %v644, 113
        %v813 = vpop.permute.xlu0 %812
        %814 = vrot.lane.b32.xlu0 %v647, 113
        %v815 = vpop.permute.xlu0 %814
        %816 = vrot.lane.b32.xlu0 %v648, 113
        %v817 = vpop.permute.xlu0 %816
        %v818 = vsel %vm407, %v811, %v813
        %v819 = vsel %vm407, %v815, %v817
        %v826 = vsel %vm407, %v813, %v811
        %v827 = vsel %vm407, %v817, %v815
        %v828 = vlaneseq
        %v829 = vshrl.u32 %v828, 7
        %v830 = vsub.s32 6, %v829
        %v831 = vrot.slane %v652, %v830
        %v832 = vlaneseq
        %v833 = vshrl.u32 %v832, 7
        %v834 = vsub.s32 6, %v833
        %v835 = vrot.slane %v653, %v834
        %v836 = vmul.f32 %v818, %v831
        %v837 = vmul.f32 %v826, %v835
        %v838 = vmul.f32 %v819, %v831
        %v839 = vmul.f32 %v827, %v835
        %840 = vrot.lane.b32.xlu0 %v643, 112
        %v841 = vpop.permute.xlu0 %840
        %842 = vrot.lane.b32.xlu0 %v644, 112
        %v843 = vpop.permute.xlu0 %842
        %844 = vrot.lane.b32.xlu0 %v647, 112
        %v845 = vpop.permute.xlu0 %844
        %846 = vrot.lane.b32.xlu0 %v648, 112
        %v847 = vpop.permute.xlu0 %846
        %v848 = vsel %vm427, %v841, %v843
        %v849 = vsel %vm427, %v845, %v847
        %v856 = vsel %vm427, %v843, %v841
        %v857 = vsel %vm427, %v847, %v845
        %v858 = vlaneseq
        %v859 = vshrl.u32 %v858, 7
        %v860 = vsub.s32 7, %v859
        %v861 = vrot.slane %v652, %v860
        %v862 = vlaneseq
        %v863 = vshrl.u32 %v862, 7
        %v864 = vsub.s32 7, %v863
        %v865 = vrot.slane %v653, %v864
        %v866 = vmul.f32 %v848, %v861
        %v867 = vmul.f32 %v856, %v865
        %v868 = vmul.f32 %v849, %v861
        %v869 = vmul.f32 %v857, %v865
        %870 = vrot.lane.b32.xlu0 %v643, 111
        %v871 = vpop.permute.xlu0 %870
        %872 = vrot.lane.b32.xlu0 %v644, 111
        %v873 = vpop.permute.xlu0 %872
        %874 = vrot.lane.b32.xlu0 %v647, 111
        %v875 = vpop.permute.xlu0 %874
        %876 = vrot.lane.b32.xlu0 %v648, 111
        %v877 = vpop.permute.xlu0 %876
        %v878 = vsel %vm447, %v871, %v873
        %v879 = vsel %vm447, %v875, %v877
        %v886 = vsel %vm447, %v873, %v871
        %v887 = vsel %vm447, %v877, %v875
        %v888 = vlaneseq
        %v889 = vshrl.u32 %v888, 7
        %v890 = vsub.s32 0, %v889
        %v891 = vrot.slane %v654, %v890
        %v892 = vlaneseq
        %v893 = vshrl.u32 %v892, 7
        %v894 = vsub.s32 0, %v893
        %v895 = vrot.slane %v655, %v894
        %v896 = vmul.f32 %v878, %v891
        %v897 = vmul.f32 %v886, %v895
        %v898 = vmul.f32 %v879, %v891
        %v899 = vmul.f32 %v887, %v895
        %v904 = vrot.slane %v716, 7
        %v905 = vrot.slane %v717, 7
        %v906 = vrot.slane %v718, 7
        %v907 = vsel %vm515, %v904, %v906
        %v908 = vrot.slane %v719, 7
        %v909 = vsel %vm515, %v905, %v908
        %v918 = vrot.slane %v746, 6
        %v919 = vrot.slane %v747, 6
        %v920 = vrot.slane %v748, 6
        %v921 = vsel %vm506, %v918, %v920
        %v922 = vrot.slane %v749, 6
        %v923 = vsel %vm506, %v919, %v922
        %v932 = vrot.slane %v776, 5
        %v933 = vrot.slane %v777, 5
        %v934 = vrot.slane %v778, 5
        %v935 = vsel %vm521, %v932, %v934
        %v936 = vrot.slane %v779, 5
        %v937 = vsel %vm521, %v933, %v936
        %v942 = vrot.slane %v643, 4
        %v943 = vrot.slane %v644, 4
        %v944 = vrot.slane %v647, 4
        %v945 = vsel %vm512, %v942, %v944
        %v946 = vrot.slane %v648, 4
        %v947 = vsel %vm512, %v943, %v946
        %v956 = vrot.slane %v806, 3
        %v957 = vrot.slane %v807, 3
        %v958 = vrot.slane %v808, 3
        %v959 = vsel %vm503, %v956, %v958
        %v960 = vrot.slane %v809, 3
        %v961 = vsel %vm503, %v957, %v960
        %v970 = vrot.slane %v836, 2
        %v971 = vrot.slane %v837, 2
        %v972 = vrot.slane %v838, 2
        %v973 = vsel %vm518, %v970, %v972
        %v974 = vrot.slane %v839, 2
        %v975 = vsel %vm518, %v971, %v974
        %v984 = vrot.slane %v866, 1
        %v985 = vrot.slane %v867, 1
        %v986 = vrot.slane %v868, 1
        %v987 = vsel %vm509, %v984, %v986
        %v988 = vrot.slane %v869, 1
        %v989 = vsel %vm509, %v985, %v988
        %v994 = vsel %vm515, %v688, %v904
        %v995 = vsel %vm515, %v689, %v905
        %v996 = vsel %vm506, %v907, %v918
        %v997 = vsel %vm506, %v909, %v919
        %v998 = vsel %vm521, %v921, %v932
        %v999 = vsel %vm521, %v923, %v933
        %v1000 = vsel %vm512, %v935, %v942
        %v1001 = vsel %vm512, %v937, %v943
        %v1002 = vsel %vm503, %v945, %v956
        %v1003 = vsel %vm503, %v947, %v957
        %v1004 = vsel %vm518, %v959, %v970
        %v1005 = vsel %vm518, %v961, %v971
        %v1006 = vsel %vm509, %v973, %v984
        %v1007 = vsel %vm509, %v975, %v985
        %vm1008 = vcmask 662528
        %v1010 = vsel %vm1008, %v649, 0
        %v1013 = vsel %vm1008, %v650, 0
        %v1016 = vsel %vm515, %v898, 0
        %v1019 = vsel %vm515, %v899, 0
        %1021 = vmatprep.subr.mxu0 %v687
        %1022 = vmatpush1.msra.mxu0 %v686
        %1023 = vmatprep.subr.mxu0 %v995
        %1024 = vmatpush1.msra.mxu0 %v994
        %1025 = vmatprep.subr.mxu0 %v997
        %1026 = vmatpush1.msra.mxu0 %v996
        %1027 = vmatprep.subr.mxu0 %v999
        %1028 = vmatpush1.msra.mxu0 %v998
        %1029 = vmatprep.subr.mxu0 %v1001
        %1030 = vmatpush1.msra.mxu0 %v1000
        %1031 = vmatprep.subr.mxu0 %v1003
        %1032 = vmatpush1.msra.mxu0 %v1002
        %1033 = vmatprep.subr.mxu0 %v1005
        %1034 = vmatpush1.msra.mxu0 %v1004
        %1035 = vmatprep.subr.mxu0 %v1007
        %1036 = vmatpush1.msra.mxu0 %v1006
        %1037 = vmatprep.subr.mxu0 %v989
        %1038 = vmatpush1.msra.mxu0 %v987
        %1039 = vmatprep.subr.mxu0 %v897
        %1040 = vmatpush1.msra.mxu0 %v896
        %1041 = vmatprep.subr.mxu0 %v1019
        %1042 = vmatpush1.msra.mxu0 %v1016
        %1043 = vmatprep.subr.mxu0 0.0
        %1044 = vmatpush1.msra.mxu0 0.0
        %1045 = vmatprep.subr.mxu0 0.0
        %1046 = vmatpush1.msra.mxu0 0.0
        %1047 = vmatprep.subr.mxu0 0.0
        %1048 = vmatpush1.msra.mxu0 0.0
        %1049 = vmatprep.subr.mxu0 0.0
        %1050 = vmatpush1.msra.mxu0 0.0
        %1051 = vmatprep.subr.mxu0 0.0
        %1052 = vmatpush1.msra.mxu0 0.0
        %1053 = vmatprep.subr.mxu0 0.0
        %1054 = vmatpush1.msra.mxu0 0.0
        %1055 = vmatprep.subr.mxu0 0.0
        %1056 = vmatpush1.msra.mxu0 0.0
        %1057 = vmatprep.subr.mxu0 0.0
        %1058 = vmatpush1.msra.mxu0 0.0
        %1059 = vmatprep.subr.mxu0 0.0
        %1060 = vmatpush1.msra.mxu0 0.0
        %1061 = vmatprep.subr.mxu0 0.0
        %1062 = vmatpush1.msra.mxu0 0.0
        %1063 = vmatprep.subr.mxu0 0.0
        %1064 = vmatpush1.msra.mxu0 0.0
        %1065 = vmatprep.subr.mxu0 0.0
        %1066 = vmatpush1.msra.mxu0 0.0
        %1067 = vmatprep.subr.mxu0 0.0
        %1068 = vmatpush1.msra.mxu0 0.0
        %1069 = vmatprep.subr.mxu0 0.0
        %1070 = vmatpush1.msra.mxu0 0.0
        %1071 = vmatprep.subr.mxu0 0.0
        %1072 = vmatpush1.msra.mxu0 0.0
        %1073 = vmatprep.subr.mxu0 0.0
        %1074 = vmatpush1.msra.mxu0 0.0
        %1075 = vmatprep.subr.mxu0 0.0
        %1076 = vmatpush1.msra.mxu0 0.0
        %1077 = vmatprep.subr.mxu0 0.0
        %1078 = vmatpush1.msra.mxu0 0.0
        %1079 = vmatprep.subr.mxu0 0.0
        %1080 = vmatpush1.msra.mxu0 0.0
        %1081 = vmatprep.subr.mxu0 0.0
        %1082 = vmatpush1.msra.mxu0 0.0
        %1083 = vmatprep.subr.mxu0 0.0
        %1084 = vmatpush1.msra.mxu0 0.0
        %1085 = vmatprep.mubr.f32.mxu0 0.0
        %1086 = vmatmul.mubr.f32.gmra.mrb[0].mxu0 %v1010
        %v1087 = vpop.f32.mrb[0].mxu0
        %v1088 = vadd.f32 0.0, %v1087
        %v1089 = vpop.f32.mrb[0].mxu0
        %v1090 = vadd.f32 0.0, %v1089
        %1091 = vmatprep.mubr.f32.mxu0 0.0
        %1092 = vmatmul.mubr.f32.gmra.mrb[0].mxu0 %v1013
        %v1093 = vpop.f32.mrb[0].mxu0
        %v1094 = vadd.f32 0.0, %v1093
        %v1095 = vpop.f32.mrb[0].mxu0
        %v1096 = vadd.f32 0.0, %v1095
        %1097 = vdwg.mxu0
        %v1098 = vadd.f32 %v1094, 0.5
        %v1099 = vadd.f32 %v1096, 0.5
        %v1100 = vfloor.f32 %v1098
        %v1101 = vfloor.f32 %v1099
        %vm1102 = vcmp.gt.f32.partialorder %v1100, 0.0
        %vm1103 = vcmp.gt.f32.partialorder %v1101, 0.0
        %v1104 = vsel %vm1102, %v1100, 1.0
        %v1105 = vsel %vm1103, %v1101, 1.0
        %v1106 = vrcp.pop %v1104
        %v1107 = vrcp.pop %v1105
        %v1108 = vsel %vm1102, %v1106, 0.0
        %v1109 = vsel %vm1103, %v1107, 0.0
        %1111 = vset.pattern.permute.xlu0 0
        %1112 = vperm.xlu0 %1111, %v651
        %v1113 = vpop.permute.xlu0 %1112
        %v1115 = vadd.f32 %v1088, %v1113
        %v1116 = vadd.f32 %v1090, %v1113
        %v1117 = vmax.f32 %v1115, 0.0
        %v1118 = vmax.f32 %v1116, 0.0
        %v1119 = vlaneseq
        %v1120 = vshrl.u32 %v1119, 7
        %v1121 = vsub.s32 0, %v1120
        %v1122 = vrot.slane %v1108, %v1121
        %v1123 = vlaneseq
        %v1124 = vshrl.u32 %v1123, 7
        %v1125 = vsub.s32 0, %v1124
        %v1126 = vrot.slane %v1109, %v1125
        %v1127 = vmul.f32 %v1117, %v1122
        %v1128 = vmul.f32 %v1118, %v1126
        %1129 = vst [vmem:[%s286] sm:$0xff] %v1127
        %1130 = vst [vmem:[%s286 + $0x8] sm:$0xff] %v1128
        %s1131 = sand.u32 %s182, 1
        %s1132 = scalar_lea.sflag [#allocation4], %s1131
        %s1133 = sand.u32 %s182, 1
        %s1134 = smul.addr %s1133, 16
        %s1135 = scalar_lea.vmem [#allocation5], %s1134
        // Predicated region
        $region53: #{tpu_custom_call.1} parent=47 // pred_check
          %p1136 = pneg %p192
        $region54: #{tpu_custom_call.1} parent=47 // pred_check_branch
          %1138 = sbr.rel (%p1136) target = $region56
        $region55: #{tpu_custom_call.1} parent=47 // pred_region
          %s1140 = ssub.s32 256, 256
          %1141 = vsyncadd %s1132, %s1140
          %s1142 = smul.addr %s22, 2
          %s1143 = smul.addr %s1142, 128
          %s1144 = scalar_lea.hbm %s7, %s1143
          %s1146 = sshll.u32 %s1135, 4
          %s1147 = int_to_ptr.vmem [resolvable:$true] %s1146
          %1149 = dma.vmem_to_hbm [thread:$0]  %s1147, 256, %s1144, %s1132
        $region56: #{tpu_custom_call.1} parent=47 // pred_fallthru
          _
      $region48: #{tpu_custom_call.1} parent=5 // pred_fallthru
        _
      %p1150 = scmp.le.s32.totalorder 2, %s17
      // Predicated region
      $region57: #{tpu_custom_call.1} parent=5 // pred_check
        %p1151 = pneg %p1150
      $region58: #{tpu_custom_call.1} parent=5 // pred_check_branch
        %1153 = sbr.rel (%p1151) target = $region60
      $region59: #{tpu_custom_call.1} parent=5 // pred_region
        %s1154 = ssub.s32 %s17, 2
        // Predicated region
        $region61: #{tpu_custom_call.1} parent=59 // pred_check
          %p1155 = pneg %p198
        $region62: #{tpu_custom_call.1} parent=59 // pred_check_branch
          %1157 = sbr.rel (%p1155) target = $region64
        $region63: #{tpu_custom_call.1} parent=59 // pred_region
          %s1158 = sand.u32 %s183, 1
          %s1159 = scalar_lea.sflag [#allocation4], %s1158
          %s1160 = sand.u32 %s183, 1
          %s1161 = smul.addr %s1160, 16
          %s1162 = scalar_lea.vmem [#allocation5], %s1161
          %1163 = dma.done %s1159, 256
        $region64: #{tpu_custom_call.1} parent=59 // pred_fallthru
          _
      $region60: #{tpu_custom_call.1} parent=5 // pred_fallthru
        _
    $region6: #{tpu_custom_call.1} parent=1 // loop_footer
      %s21 = sadd.s32 1, %s17
    $region7: #{tpu_custom_call.1} parent=1 // loop_footer_branch
      %16 = sbr.rel target = $region3
    $region8: #{tpu_custom_call.1} parent=1 // loop_exit
      _
    %1164 = vsyncpa [#allocation3], 1
    %s1165 = scalar_lea.sflag [#allocation3], 1
    %1166 = vsyncpa %s1165, 1
    %1167 = vsyncpa [#allocation4], 1
    %s1168 = scalar_lea.sflag [#allocation4], 1
    %1169 = vsyncpa %s1168, 1

</llo_original>
